<compile_context>
chip_gen: v7x
topology: tpu7x:2x2x1
jax: 0.10.0
libtpu: 0.0.40
codegen_flags: <defaults>
</compile_context>

<pallas_src>
import jax
import jax.numpy as jnp
from jax.experimental import pallas as pl
from jax.experimental.pallas import tpu as pltpu


# --------------------------------------------------------------------------
# Generation-aware sizing
# --------------------------------------------------------------------------
def _device_config():
    """Returns (target_output_tile_bytes, vmem_limit_bytes_or_None)."""
    kind = ""
    try:
        kind = jax.devices()[0].device_kind.lower()
    except Exception:
        pass
    if "v7" in kind or "7x" in kind:
        # v7x: 3.2 TB/s HBM -> big tiles to amortize ~0.35us/step overhead.
        # Double-buffered 2*(x tile + out tile) ~= 32 MiB exceeds the 32 MiB
        # scoped-VMEM default, so raise the limit (still << 64 MiB per TC).
        return 8 * 1024 * 1024, 48 * 1024 * 1024
    if "v6" in kind:
        # v6e: 2*(4+4) MiB = 16 MiB fits the 32 MiB scoped default.
        return 4 * 1024 * 1024, None
    # v5e (and unknown): 2 MiB tiles; 2*(2+2) MiB fits the 16 MiB default and
    # a tile is already ~5us of HBM traffic, so bigger tiles buy little.
    return 2 * 1024 * 1024, None


def _compiler_params(vmem_limit_bytes):
    kwargs = dict(dimension_semantics=("parallel",))
    if vmem_limit_bytes is not None:
        kwargs["vmem_limit_bytes"] = vmem_limit_bytes
    return pltpu.CompilerParams(**kwargs)


def _batch_tile(n_rows: int, out_row_bytes: int, itemsize: int,
                target_bytes: int, min_steps: int = 4) -> int:
    """Rows per grid step.

    * sized so the OUTPUT tile is ~target_bytes,
    * rounded to the dtype's sublane packing (8 f32 / 16 bf16 / 32 int8),
    * capped so the batch grid has several steps when B allows it (dual-TC
      sharding on v7x + pipeline overlap).
    """
    mult = max(8, 32 // max(itemsize, 1))
    tb = max(mult, (target_bytes // max(out_row_bytes, 1)) // mult * mult)
    steps = min(min_steps, n_rows // mult)
    if steps >= 2:
        per = (n_rows + steps - 1) // steps
        per = max(mult, (per // mult) * mult)  # round down to sublane packing
        tb = min(tb, per)
    return n_rows if tb >= n_rows else tb


# --------------------------------------------------------------------------
# Kernels
# --------------------------------------------------------------------------
def _mul_flat_kernel(x_ref, w_ref, o_ref):
    # x_ref: (TB, K*D), w_ref: (1, K*D) (sublane-broadcast), o_ref: (TB, K*D)
    o_ref[...] = (x_ref[...] * w_ref[...]).astype(o_ref.dtype)


def _mul_bcast_kernel(x_ref, w_ref, o_ref):
    # x_ref: (TB, 1, D), w_ref: (1, K, D), o_ref: (TB, K, D)   [D % 128 == 0]
    o_ref[...] = (x_ref[...] * w_ref[...]).astype(o_ref.dtype)


def _make_bcast_flat_kernel(K: int):
    def kernel(x_ref, w_ref, o_ref):
        # x_ref: (TB, D), w_ref: (1, K*D), o_ref: (TB, K*D)  [lane-dense out]
        # Replicate x across K along lanes: out[:, k*D + d] = x[:, d], which
        # matches the row-major reshape of the (B, K, D) reference output.
        x = x_ref[...]
        xk = jnp.concatenate([x] * K, axis=-1) if K > 1 else x
        o_ref[...] = (xk * w_ref[...]).astype(o_ref.dtype)
    return kernel


# --------------------------------------------------------------------------
# Wrappers
# --------------------------------------------------------------------------
def _forward_3d(x, weight, out_dtype, target_bytes, cparams):
    B, K, D = x.shape
    KD = K * D
    xf = x.reshape(B, KD)            # free (row-major contiguous)
    wf = weight.reshape(1, KD)
    itemsize = jnp.dtype(out_dtype).itemsize
    tb = _batch_tile(B, KD * itemsize, itemsize, target_bytes)
    out = pl.pallas_call(
        _mul_flat_kernel,
        out_shape=jax.ShapeDtypeStruct((B, KD), out_dtype),
        grid_spec=pltpu.PrefetchScalarGridSpec(
            num_scalar_prefetch=0,
            grid=(pl.cdiv(B, tb),),
            in_specs=[
                pl.BlockSpec((tb, KD), lambda b: (b, 0)),   # x: tb rows / step
                pl.BlockSpec((1, KD), lambda b: (0, 0)),    # weight: resident
            ],
            out_specs=pl.BlockSpec((tb, KD), lambda b: (b, 0)),
        ),
        compiler_params=cparams,
    )(xf, wf)
    return out.reshape(B, K, D)


def _forward_2d(x, weight, out_dtype, target_bytes, cparams):
    B, D = x.shape
    _, K, Dw = weight.shape
    assert D == Dw
    KD = K * D
    itemsize = jnp.dtype(out_dtype).itemsize
    tb = _batch_tile(B, KD * itemsize, itemsize, target_bytes)

    if D % 128 == 0:
        # D is lane-aligned: (tb, K, D) output stores are already unmasked.
        x3 = x.reshape(B, 1, D)      # free; K-broadcast happens in the kernel
        return pl.pallas_call(
            _mul_bcast_kernel,
            out_shape=jax.ShapeDtypeStruct((B, K, D), out_dtype),
            grid_spec=pltpu.PrefetchScalarGridSpec(
                num_scalar_prefetch=0,
                grid=(pl.cdiv(B, tb),),
                in_specs=[
                    pl.BlockSpec((tb, 1, D), lambda b: (b, 0, 0)),  # no K copy in HBM
                    pl.BlockSpec((1, K, D), lambda b: (0, 0, 0)),   # resident weight
                ],
                out_specs=pl.BlockSpec((tb, K, D), lambda b: (b, 0, 0)),
            ),
            compiler_params=cparams,
        )(x3, weight)

    # D % 128 != 0: emit a lane-dense (B, K*D) output (otherwise every store is
    # a masked vst on D/128 of the lanes and the K x-larger write stream tanks).
    # x is still read only once per row; the K-replication is in-register.
    wf = weight.reshape(1, KD)
    out = pl.pallas_call(
        _make_bcast_flat_kernel(K),
        out_shape=jax.ShapeDtypeStruct((B, KD), out_dtype),
        grid_spec=pltpu.PrefetchScalarGridSpec(
            num_scalar_prefetch=0,
            grid=(pl.cdiv(B, tb),),
            in_specs=[
                pl.BlockSpec((tb, D), lambda b: (b, 0)),    # x: B*D HBM reads total
                pl.BlockSpec((1, KD), lambda b: (0, 0)),    # resident flat weight
            ],
            out_specs=pl.BlockSpec((tb, KD), lambda b: (b, 0)),
        ),
        compiler_params=cparams,
    )(x, wf)
    return out.reshape(B, K, D)


def adapter_forward(x, weight):
    """x: (B, K, D) or (B, D); weight: (1, K, D). Returns (B, K, D)."""
    _, K, D = weight.shape
    out_dtype = jnp.result_type(x.dtype, weight.dtype)
    target_bytes, vmem_limit = _device_config()
    cparams = _compiler_params(vmem_limit)
    if x.ndim == 2:
        assert x.shape[1] == D
        return _forward_2d(x, weight, out_dtype, target_bytes, cparams)
    assert x.ndim == 3 and x.shape[1] == K and x.shape[2] == D
    return _forward_3d(x, weight, out_dtype, target_bytes, cparams)


if __name__ == "__main__":
    key = jax.random.PRNGKey(0)
    kw, k1, k2, k3, k4 = jax.random.split(key, 5)

    # Shapes consistent with the module: B=2, k=8, d=32
    B, K, D = 2, 8, 32
    # nn.init.normal_(weight, mean=1) -> Normal(mean=1, std=1)
    weight = jax.random.normal(kw, (1, K, D), dtype=jnp.float32) + 1.0

    # 3D input path
    x3 = jax.random.normal(k1, (B, K, D), dtype=jnp.float32)
    out3 = jax.block_until_ready(adapter_forward(x3, weight))
    assert out3.shape == (B, K, D)
    assert jnp.allclose(out3, x3 * weight, atol=1e-6), "3D path mismatch"

    # 2D input path, D % 128 != 0 -> lane-dense (B, K*D) output kernel
    x2 = jax.random.normal(k2, (B, D), dtype=jnp.float32)
    out2 = jax.block_until_ready(adapter_forward(x2, weight))
    assert out2.shape == (B, K, D)
    assert jnp.allclose(out2, x2[:, None, :] * weight, atol=1e-6), "2D path mismatch"

    # Multi-step batch grid with a partial last tile (exercises tiling/masking)
    B3 = 44
    x3b = jax.random.normal(k3, (B3, K, D), dtype=jnp.float32)
    out3b = jax.block_until_ready(adapter_forward(x3b, weight))
    assert jnp.allclose(out3b, x3b * weight, atol=1e-6), "tiled 3D path mismatch"

    # 2D input path with D % 128 == 0 -> keeps the (tb, K, D) block layout
    K4, D4 = 4, 128
    w4 = jax.random.normal(k4, (1, K4, D4), dtype=jnp.float32) + 1.0
    x4 = jax.random.normal(k1, (8, D4), dtype=jnp.float32)
    out4 = jax.block_until_ready(adapter_forward(x4, w4))
    assert jnp.allclose(out4, x4[:, None, :] * w4, atol=1e-6), "aligned 2D path mismatch"

    print("KERNEL_OK")
</pallas_src>

<mosaic_0001>
module attributes {stable_mosaic.version = 11 : i64} {
  func.func @_mul_flat_kernel(%arg0: i32, %arg1: memref<2x256xf32, #tpu.memory_space<vmem>>, %arg2: memref<1x256xf32, #tpu.memory_space<vmem>>, %arg3: memref<2x256xf32, #tpu.memory_space<vmem>>) attributes {dimension_semantics = [#tpu.dimension_semantics<parallel>], iteration_bounds = array<i64: 1>, scalar_prefetch = 0 : i64, scratch_operands = 0 : i64, tpu.core_type = #tpu.core_type<tc>, window_params = [{transform_indices = @transform_0, window_bounds = array<i64: 2, 256>}, {pipeline_mode = #tpu.pipeline_mode<synchronous>, transform_indices = @transform_1, window_bounds = array<i64: 1, 256>}, {transform_indices = @transform_2, window_bounds = array<i64: 2, 256>}]} {
    %c0 = arith.constant 0 : index
    %c0_0 = arith.constant 0 : index
    %0 = vector.load %arg1[%c0, %c0_0] : memref<2x256xf32, #tpu.memory_space<vmem>>, vector<2x256xf32>
    %c0_1 = arith.constant 0 : index
    %c0_2 = arith.constant 0 : index
    %1 = vector.load %arg2[%c0_1, %c0_2] : memref<1x256xf32, #tpu.memory_space<vmem>>, vector<1x256xf32>
    %2 = vector.broadcast %1 : vector<1x256xf32> to vector<2x256xf32>
    %3 = arith.mulf %0, %2 : vector<2x256xf32>
    %c0_3 = arith.constant 0 : index
    %c0_4 = arith.constant 0 : index
    %4 = vector.load %arg3[%c0_3, %c0_4] : memref<2x256xf32, #tpu.memory_space<vmem>>, vector<2x256xf32>
    tpu.vector_store %arg3[%c0_3, %c0_4], %3 {strides = array<i32>} : memref<2x256xf32, #tpu.memory_space<vmem>>, vector<2x256xf32>,
    return
  }
  func.func @transform_0(%arg0: i32) -> (i32, i32) {
    %c0_i32 = arith.constant 0 : i32
    %c0_i32_0 = arith.constant 0 : i32
    return %arg0, %c0_i32 : i32, i32
  }
  func.func @transform_1(%arg0: i32) -> (i32, i32) {
    %c0_i32 = arith.constant 0 : i32
    %c0_i32_0 = arith.constant 0 : i32
    %c0_i32_1 = arith.constant 0 : i32
    return %c0_i32, %c0_i32_0 : i32, i32
  }
  func.func @transform_2(%arg0: i32) -> (i32, i32) {
    %c0_i32 = arith.constant 0 : i32
    %c0_i32_0 = arith.constant 0 : i32
    return %arg0, %c0_i32 : i32, i32
  }
}

</mosaic_0001>

<llo_original>
// kernel: tpu_custom_call.1
$region0: #{tpu_custom_call.1}
  #allocation0 [shape = 'u32[]', space=smem, size = 0x4, offset = 0x4, fixed_abs, tag = 'smem constant byte address 0x4 - core index']
  #allocation1 [shape = 'u32[144,128]{1,0:T(1,128)}', space=vmem, size = 0x12000, scoped, tag = 'internal scratch']
  %s0 = inlined_call_operand.hbm [shape: f32[2,256], index: 0, kind: input, shape index: {}]
  %s1 = inlined_call_operand.vmem [shape: f32[1,256], index: 1, kind: input, shape index: {}]
  %s2 = inlined_call_operand.hbm [shape: f32[2,256], index: 2, kind: output, shape index: {}]
  %s3 = sld [smem:[#allocation0]]
  $region22: #{tpu_custom_call.1} parent=0
    _
  %s5 = ssub.s32 1, %s3
  %s6 = scalar_select 0, %s5, %s3
  $region1: #{tpu_custom_call.1} parent=0
    #allocation2 [shape = 'u8[2048]{0}', space=vmem, size = 0x800, scoped, tag = 'input window, operand 0, single buffered']
    #allocation3 [shape = 's32[1]{0}', space=sflag, size = 0x4, scoped, tag = 'scoped memory for tpu_custom_call.1']
    #allocation4 [shape = 's32[1]{0}', space=sflag, size = 0x4, scoped, tag = 'scoped memory for tpu_custom_call.1']
    #allocation5 [shape = 'u8[2048]{0}', space=vmem, size = 0x800, scoped, tag = 'output window, operand 0, single buffered']
    %7 = vsyncpa [#allocation3], 0
    %8 = vsyncpa [#allocation4], 0
    // Predicated region
    $region2: #{tpu_custom_call.1} parent=1 // pred_check
      _
    $region3: #{tpu_custom_call.1} parent=1 // pred_check_branch
      %10 = sbr.rel (0) target = $region5
    $region4: #{tpu_custom_call.1} parent=1 // pred_region
      %s12 = ssub.s32 64, 64
      %13 = vsyncadd [#allocation3], %s12
      %s15 = sshll.u32 [#allocation2], 4
      %s16 = int_to_ptr.vmem [resolvable:$true] %s15
      %18 = dma.hbm_to_vmem [thread:$0]  %s0, 64, %s16, [#allocation3]
    $region5: #{tpu_custom_call.1} parent=1 // pred_fallthru
      _
    // Predicated region
    $region6: #{tpu_custom_call.1} parent=1 // pred_check
      _
    $region7: #{tpu_custom_call.1} parent=1 // pred_check_branch
      %20 = sbr.rel (0) target = $region9
    $region8: #{tpu_custom_call.1} parent=1 // pred_region
      _
    $region9: #{tpu_custom_call.1} parent=1 // pred_fallthru
      _
    // Predicated region
    $region10: #{tpu_custom_call.1} parent=1 // pred_check
      _
    $region11: #{tpu_custom_call.1} parent=1 // pred_check_branch
      %22 = sbr.rel (0) target = $region13
    $region12: #{tpu_custom_call.1} parent=1 // pred_region
      %23 = dma.done [#allocation3], 64
    $region13: #{tpu_custom_call.1} parent=1 // pred_fallthru
      _
    %v24 = vld [vmem:[#allocation2] sm:$0xf]
    %v25 = vld [vmem:[%s1] sm:$0x3]
    %v27 = vlaneseq
    %v28 = vshrl.u32 %v27, 7
    %v29 = vsub.s32 0, %v28
    %v30 = vrot.slane %v25, %v29
    %v31 = vlaneseq
    %v32 = vshrl.u32 %v31, 7
    %v33 = vsub.s32 1, %v32
    %v34 = vrot.slane %v25, %v33
    %v35 = vcombine.low %v30, %v34
    %v37 = vunpack.c.l.s4 1983009808
    %v38 = vunpack.c.0.s8 %v37
    %v39 = vlaneseq
    %v40 = vshrl.u32 %v39, 7
    %v41 = vsub.s32 %v38, %v40
    %v42 = vrot.slane %v35, %v41
    %v44 = vmul.f32 %v24, %v42
    %45 = vst [vmem:[#allocation5] sm:$0xf] %v44
    // Predicated region
    $region14: #{tpu_custom_call.1} parent=1 // pred_check
      _
    $region15: #{tpu_custom_call.1} parent=1 // pred_check_branch
      %47 = sbr.rel (0) target = $region17
    $region16: #{tpu_custom_call.1} parent=1 // pred_region
      %s49 = ssub.s32 64, 64
      %50 = vsyncadd [#allocation4], %s49
      %s52 = sshll.u32 [#allocation5], 4
      %s53 = int_to_ptr.vmem [resolvable:$true] %s52
      %55 = dma.vmem_to_hbm [thread:$0]  %s53, 64, %s2, [#allocation4]
    $region17: #{tpu_custom_call.1} parent=1 // pred_fallthru
      _
    // Predicated region
    $region18: #{tpu_custom_call.1} parent=1 // pred_check
      _
    $region19: #{tpu_custom_call.1} parent=1 // pred_check_branch
      %57 = sbr.rel (0) target = $region21
    $region20: #{tpu_custom_call.1} parent=1 // pred_region
      %58 = dma.done [#allocation4], 64
    $region21: #{tpu_custom_call.1} parent=1 // pred_fallthru
      _
    %59 = vsyncpa [#allocation3], 1
    %60 = vsyncpa [#allocation4], 1

</llo_original>
